<compile_context>
chip_gen: v6e
topology: v6e:2x2x1
jax: 0.10.0
libtpu: 0.0.40
codegen_flags: <defaults>
</compile_context>

<pallas_src>
import jax
import jax.numpy as jnp
from jax import lax
from jax.experimental import pallas as pl
from jax.experimental.pallas import tpu as pltpu

_LANES = 128      # boxes along the lane axis
_MAX_SUB = 512    # boxes along the sublane axis per grid step
                  # -> up to 512*128 = 65536 boxes / step, 1 MiB per input block


def _recip(x):
    """Reciprocal via EUP approximation + one Newton step (cheap, ~1 ULP)."""
    r = pl.reciprocal(x, approx=True)
    return r * (2.0 - x * r)


def _make_kernel(loss_type, has_weights, reduce_out, n_valid, sub):
    def kernel(*refs):
        if has_weights:
            pred_ref, tgt_ref, w_ref, out_ref = refs
        else:
            pred_ref, tgt_ref, out_ref = refs
            w_ref = None

        # Coordinate planes, each a full (sub, 128) tile.
        px, py, pw, ph = pred_ref[0], pred_ref[1], pred_ref[2], pred_ref[3]
        tx, ty, tw, th = tgt_ref[0], tgt_ref[1], tgt_ref[2], tgt_ref[3]

        # Hoist half-extents and box corners; reused by the GIoU enclosing box.
        pw2 = pw * 0.5
        ph2 = ph * 0.5
        tw2 = tw * 0.5
        th2 = th * 0.5
        p_x1, p_x2 = px - pw2, px + pw2
        p_y1, p_y2 = py - ph2, py + ph2
        t_x1, t_x2 = tx - tw2, tx + tw2
        t_y1, t_y2 = ty - th2, ty + th2

        tl_x = jnp.maximum(p_x1, t_x1)
        tl_y = jnp.maximum(p_y1, t_y1)
        br_x = jnp.minimum(p_x2, t_x2)
        br_y = jnp.minimum(p_y2, t_y2)

        area_p = pw * ph
        area_g = tw * th

        en = ((tl_x < br_x) & (tl_y < br_y)).astype(jnp.float32)
        area_i = (br_x - tl_x) * (br_y - tl_y) * en
        area_u = area_p + area_g - area_i
        iou = area_i * _recip(area_u + 1e-16)

        if loss_type == "iou":
            loss = 1.0 - iou * iou
        elif loss_type == "giou":
            c_tl_x = jnp.minimum(p_x1, t_x1)
            c_tl_y = jnp.minimum(p_y1, t_y1)
            c_br_x = jnp.maximum(p_x2, t_x2)
            c_br_y = jnp.maximum(p_y2, t_y2)
            area_c = (c_br_x - c_tl_x) * (c_br_y - c_tl_y)
            giou = iou - (area_c - area_u) * _recip(jnp.maximum(area_c, 1e-16))
            loss = 1.0 - jnp.clip(giou, -1.0, 1.0)
        else:
            raise NotImplementedError(loss_type)

        if has_weights:
            loss = loss * w_ref[...]

        if not reduce_out:
            out_ref[...] = loss
        else:
            # Mask padded boxes, fold this block into the per-lane accumulator
            # that stays resident across the (arbitrary) grid axis.
            i = pl.program_id(0)
            base = i * (sub * _LANES)
            s_idx = lax.broadcasted_iota(jnp.int32, (sub, _LANES), 0)
            l_idx = lax.broadcasted_iota(jnp.int32, (sub, _LANES), 1)
            valid = (base + s_idx * _LANES + l_idx) < n_valid
            part = jnp.sum(jnp.where(valid, loss, 0.0), axis=0, keepdims=True)

            @pl.when(i == 0)
            def _():
                out_ref[...] = jnp.zeros_like(out_ref)

            out_ref[...] += part

    return kernel


def iou_loss(pred, target, weights=None, reduction="none", loss_type="iou"):
    """Pallas implementation of YOLOX IOUloss.forward."""
    assert pred.shape[0] == target.shape[0]
    if pred.shape[0] == 0:
        return 0.0

    pred = jnp.reshape(pred, (-1, 4)).astype(jnp.float32)
    target = jnp.reshape(target, (-1, 4)).astype(jnp.float32)
    n = pred.shape[0]

    rows = -(-n // _LANES)                      # ceil(n / 128)
    sub = min(_MAX_SUB, -(-rows // 8) * 8)      # sublane tile (multiple of 8)
    rows_pad = -(-rows // sub) * sub
    n_pad = rows_pad * _LANES
    pad = n_pad - n
    grid = rows_pad // sub

    # (N, 4) -> (4, rows_pad, 128); pad + transpose + reshape fuse into one
    # XLA copy per input.  Box b lives at [:, b // 128, b % 128].
    def _prep(x):
        return jnp.pad(x, ((0, pad), (0, 0))).T.reshape(4, rows_pad, _LANES)

    operands = [_prep(pred), _prep(target)]
    in_specs = [
        pl.BlockSpec((4, sub, _LANES), lambda i: (0, i, 0)),
        pl.BlockSpec((4, sub, _LANES), lambda i: (0, i, 0)),
    ]

    has_weights = weights is not None
    if has_weights:
        w = jnp.reshape(jnp.asarray(weights, jnp.float32), (-1,))
        assert w.shape[0] == n
        operands.append(jnp.pad(w, (0, pad)).reshape(rows_pad, _LANES))
        in_specs.append(pl.BlockSpec((sub, _LANES), lambda i: (i, 0)))

    reduce_out = reduction in ("mean", "sum")
    kernel = _make_kernel(loss_type, has_weights, reduce_out, n, sub)

    if reduce_out:
        # Per-lane partial sums accumulated in-kernel; final 128-wide fold and
        # the mean's divide-by-N are trivial host-side ops.
        out_shape = jax.ShapeDtypeStruct((1, _LANES), jnp.float32)
        out_specs = pl.BlockSpec((1, _LANES), lambda i: (0, 0))
        dims = ("arbitrary",)
    else:
        out_shape = jax.ShapeDtypeStruct((rows_pad, _LANES), jnp.float32)
        out_specs = pl.BlockSpec((sub, _LANES), lambda i: (i, 0))
        dims = ("parallel",)

    result = pl.pallas_call(
        kernel,
        out_shape=out_shape,
        grid_spec=pltpu.PrefetchScalarGridSpec(
            num_scalar_prefetch=0,
            grid=(grid,),
            in_specs=in_specs,
            out_specs=out_specs,
        ),
        compiler_params=pltpu.CompilerParams(dimension_semantics=dims),
    )(*operands)

    if reduce_out:
        total = jnp.sum(result)
        return total / n if reduction == "mean" else total
    return result.reshape(-1)[:n]


def _reference_iou_loss(pred, target, weights=None, reduction="none",
                        loss_type="iou"):
    # Pure-JAX reference mirroring the PyTorch module (for sanity checking).
    pred = jnp.reshape(pred, (-1, 4))
    target = jnp.reshape(target, (-1, 4))
    tl = jnp.maximum(pred[:, :2] - pred[:, 2:] / 2, target[:, :2] - target[:, 2:] / 2)
    br = jnp.minimum(pred[:, :2] + pred[:, 2:] / 2, target[:, :2] + target[:, 2:] / 2)
    area_p = jnp.prod(pred[:, 2:], axis=1)
    area_g = jnp.prod(target[:, 2:], axis=1)
    en = jnp.prod((tl < br).astype(pred.dtype), axis=1)
    area_i = jnp.prod(br - tl, axis=1) * en
    area_u = area_p + area_g - area_i
    iou = area_i / (area_u + 1e-16)
    if loss_type == "iou":
        loss = 1 - iou ** 2
    else:
        c_tl = jnp.minimum(pred[:, :2] - pred[:, 2:] / 2, target[:, :2] - target[:, 2:] / 2)
        c_br = jnp.maximum(pred[:, :2] + pred[:, 2:] / 2, target[:, :2] + target[:, 2:] / 2)
        area_c = jnp.prod(c_br - c_tl, axis=1)
        giou = iou - (area_c - area_u) / jnp.maximum(area_c, 1e-16)
        loss = 1 - jnp.clip(giou, -1.0, 1.0)
    if weights is not None:
        loss = loss * jnp.reshape(weights, (-1,))
    if reduction == "mean":
        loss = loss.mean()
    elif reduction == "sum":
        loss = loss.sum()
    return loss


if __name__ == "__main__":
    key = jax.random.PRNGKey(0)
    k1, k2, k3, k4, k5 = jax.random.split(key, 5)

    def make_boxes(kc, ks, n):
        centers = jax.random.uniform(kc, (n, 2), jnp.float32, 0.0, 10.0)
        sizes = jax.random.uniform(ks, (n, 2), jnp.float32, 0.5, 5.0)
        return jnp.concatenate([centers, sizes], axis=1)

    # Small case matching the module's typical (num_pos, 4) inputs.
    n = 8
    pred = make_boxes(k1, k2, n)
    target = make_boxes(k3, k4, n)

    out_iou = iou_loss(pred, target, reduction="none", loss_type="iou")
    out_giou = iou_loss(pred, target, reduction="mean", loss_type="giou")

    # Larger case exercising weights + fused sum reduction.
    n2 = 1000
    ka, kb, kc, kd, kw = jax.random.split(k5, 5)
    pred2 = make_boxes(ka, kb, n2)
    target2 = make_boxes(kc, kd, n2)
    w2 = jax.random.uniform(kw, (n2,), jnp.float32, 0.0, 2.0)

    out_sum = iou_loss(pred2, target2, weights=w2, reduction="sum", loss_type="giou")
    out_none_w = iou_loss(pred2, target2, weights=w2, reduction="none", loss_type="iou")

    jax.block_until_ready((out_iou, out_giou, out_sum, out_none_w))

    ref_iou = _reference_iou_loss(pred, target, None, "none", "iou")
    ref_giou = _reference_iou_loss(pred, target, None, "mean", "giou")
    ref_sum = _reference_iou_loss(pred2, target2, w2, "sum", "giou")
    ref_none_w = _reference_iou_loss(pred2, target2, w2, "none", "iou")

    assert jnp.allclose(out_iou, ref_iou, atol=1e-5, rtol=1e-5)
    assert jnp.allclose(out_giou, ref_giou, atol=1e-5, rtol=1e-5)
    assert jnp.allclose(out_sum, ref_sum, atol=1e-3, rtol=1e-5)
    assert jnp.allclose(out_none_w, ref_none_w, atol=1e-5, rtol=1e-5)

    print("KERNEL_OK")
</pallas_src>

<mosaic_0001>
module attributes {stable_mosaic.version = 11 : i64} {
  func.func @kernel(%arg0: i32, %arg1: memref<4x8x128xf32, #tpu.memory_space<vmem>>, %arg2: memref<4x8x128xf32, #tpu.memory_space<vmem>>, %arg3: memref<8x128xf32, #tpu.memory_space<vmem>>) attributes {dimension_semantics = [#tpu.dimension_semantics<parallel>], iteration_bounds = array<i64: 1>, scalar_prefetch = 0 : i64, scratch_operands = 0 : i64, tpu.core_type = #tpu.core_type<tc>, window_params = [{transform_indices = @transform_0, window_bounds = array<i64: 4, 8, 128>}, {transform_indices = @transform_1, window_bounds = array<i64: 4, 8, 128>}, {transform_indices = @transform_2, window_bounds = array<i64: 8, 128>}]} {
    %c0 = arith.constant 0 : index
    %c0_0 = arith.constant 0 : index
    %c0_1 = arith.constant 0 : index
    %0 = vector.load %arg1[%c0, %c0_0, %c0_1] : memref<4x8x128xf32, #tpu.memory_space<vmem>>, vector<1x8x128xf32>
    %1 = vector.shape_cast %0 : vector<1x8x128xf32> to vector<8x128xf32>
    %c1 = arith.constant 1 : index
    %c0_2 = arith.constant 0 : index
    %c0_3 = arith.constant 0 : index
    %2 = vector.load %arg1[%c1, %c0_2, %c0_3] : memref<4x8x128xf32, #tpu.memory_space<vmem>>, vector<1x8x128xf32>
    %3 = vector.shape_cast %2 : vector<1x8x128xf32> to vector<8x128xf32>
    %c2 = arith.constant 2 : index
    %c0_4 = arith.constant 0 : index
    %c0_5 = arith.constant 0 : index
    %4 = vector.load %arg1[%c2, %c0_4, %c0_5] : memref<4x8x128xf32, #tpu.memory_space<vmem>>, vector<1x8x128xf32>
    %5 = vector.shape_cast %4 : vector<1x8x128xf32> to vector<8x128xf32>
    %c3 = arith.constant 3 : index
    %c0_6 = arith.constant 0 : index
    %c0_7 = arith.constant 0 : index
    %6 = vector.load %arg1[%c3, %c0_6, %c0_7] : memref<4x8x128xf32, #tpu.memory_space<vmem>>, vector<1x8x128xf32>
    %7 = vector.shape_cast %6 : vector<1x8x128xf32> to vector<8x128xf32>
    %c0_8 = arith.constant 0 : index
    %c0_9 = arith.constant 0 : index
    %c0_10 = arith.constant 0 : index
    %8 = vector.load %arg2[%c0_8, %c0_9, %c0_10] : memref<4x8x128xf32, #tpu.memory_space<vmem>>, vector<1x8x128xf32>
    %9 = vector.shape_cast %8 : vector<1x8x128xf32> to vector<8x128xf32>
    %c1_11 = arith.constant 1 : index
    %c0_12 = arith.constant 0 : index
    %c0_13 = arith.constant 0 : index
    %10 = vector.load %arg2[%c1_11, %c0_12, %c0_13] : memref<4x8x128xf32, #tpu.memory_space<vmem>>, vector<1x8x128xf32>
    %11 = vector.shape_cast %10 : vector<1x8x128xf32> to vector<8x128xf32>
    %c2_14 = arith.constant 2 : index
    %c0_15 = arith.constant 0 : index
    %c0_16 = arith.constant 0 : index
    %12 = vector.load %arg2[%c2_14, %c0_15, %c0_16] : memref<4x8x128xf32, #tpu.memory_space<vmem>>, vector<1x8x128xf32>
    %13 = vector.shape_cast %12 : vector<1x8x128xf32> to vector<8x128xf32>
    %c3_17 = arith.constant 3 : index
    %c0_18 = arith.constant 0 : index
    %c0_19 = arith.constant 0 : index
    %14 = vector.load %arg2[%c3_17, %c0_18, %c0_19] : memref<4x8x128xf32, #tpu.memory_space<vmem>>, vector<1x8x128xf32>
    %15 = vector.shape_cast %14 : vector<1x8x128xf32> to vector<8x128xf32>
    %cst = arith.constant 5.000000e-01 : f32
    %16 = vector.broadcast %cst : f32 to vector<8x128xf32>
    %17 = arith.mulf %5, %16 : vector<8x128xf32>
    %cst_20 = arith.constant 5.000000e-01 : f32
    %18 = vector.broadcast %cst_20 : f32 to vector<8x128xf32>
    %19 = arith.mulf %7, %18 : vector<8x128xf32>
    %cst_21 = arith.constant 5.000000e-01 : f32
    %20 = vector.broadcast %cst_21 : f32 to vector<8x128xf32>
    %21 = arith.mulf %13, %20 : vector<8x128xf32>
    %cst_22 = arith.constant 5.000000e-01 : f32
    %22 = vector.broadcast %cst_22 : f32 to vector<8x128xf32>
    %23 = arith.mulf %15, %22 : vector<8x128xf32>
    %24 = arith.subf %1, %17 : vector<8x128xf32>
    %25 = arith.addf %1, %17 : vector<8x128xf32>
    %26 = arith.subf %3, %19 : vector<8x128xf32>
    %27 = arith.addf %3, %19 : vector<8x128xf32>
    %28 = arith.subf %9, %21 : vector<8x128xf32>
    %29 = arith.addf %9, %21 : vector<8x128xf32>
    %30 = arith.subf %11, %23 : vector<8x128xf32>
    %31 = arith.addf %11, %23 : vector<8x128xf32>
    %32 = arith.maximumf %24, %28 : vector<8x128xf32>
    %33 = arith.maximumf %26, %30 : vector<8x128xf32>
    %34 = arith.minimumf %25, %29 : vector<8x128xf32>
    %35 = arith.minimumf %27, %31 : vector<8x128xf32>
    %36 = arith.mulf %5, %7 : vector<8x128xf32>
    %37 = arith.mulf %13, %15 : vector<8x128xf32>
    %38 = arith.cmpf olt, %32, %34 : vector<8x128xf32>
    %39 = arith.cmpf olt, %33, %35 : vector<8x128xf32>
    %40 = arith.andi %38, %39 : vector<8x128xi1>
    %41 = arith.extui %40 : vector<8x128xi1> to vector<8x128xi32>
    %42 = arith.sitofp %41 : vector<8x128xi32> to vector<8x128xf32>
    %43 = arith.subf %34, %32 : vector<8x128xf32>
    %44 = arith.subf %35, %33 : vector<8x128xf32>
    %45 = arith.mulf %43, %44 : vector<8x128xf32>
    %46 = arith.mulf %45, %42 : vector<8x128xf32>
    %47 = arith.addf %36, %37 : vector<8x128xf32>
    %48 = arith.subf %47, %46 : vector<8x128xf32>
    %cst_23 = arith.constant 1.000000e-16 : f32
    %49 = vector.broadcast %cst_23 : f32 to vector<8x128xf32>
    %50 = arith.addf %48, %49 : vector<8x128xf32>
    %51 = tpu.reciprocal %50 {approx = true} : vector<8x128xf32> -> vector<8x128xf32>
    %52 = arith.mulf %50, %51 : vector<8x128xf32>
    %cst_24 = arith.constant 2.000000e+00 : f32
    %53 = vector.broadcast %cst_24 : f32 to vector<8x128xf32>
    %54 = arith.subf %53, %52 : vector<8x128xf32>
    %55 = arith.mulf %51, %54 : vector<8x128xf32>
    %56 = arith.mulf %46, %55 : vector<8x128xf32>
    %57 = arith.mulf %56, %56 : vector<8x128xf32>
    %cst_25 = arith.constant 1.000000e+00 : f32
    %58 = vector.broadcast %cst_25 : f32 to vector<8x128xf32>
    %59 = arith.subf %58, %57 : vector<8x128xf32>
    %c0_26 = arith.constant 0 : index
    %c0_27 = arith.constant 0 : index
    %60 = vector.load %arg3[%c0_26, %c0_27] : memref<8x128xf32, #tpu.memory_space<vmem>>, vector<8x128xf32>
    tpu.vector_store %arg3[%c0_26, %c0_27], %59 {strides = array<i32>} : memref<8x128xf32, #tpu.memory_space<vmem>>, vector<8x128xf32>,
    return
  }
  func.func @transform_0(%arg0: i32) -> (i32, i32, i32) {
    %c0_i32 = arith.constant 0 : i32
    %c0_i32_0 = arith.constant 0 : i32
    %c0_i32_1 = arith.constant 0 : i32
    return %c0_i32, %arg0, %c0_i32_0 : i32, i32, i32
  }
  func.func @transform_1(%arg0: i32) -> (i32, i32, i32) {
    %c0_i32 = arith.constant 0 : i32
    %c0_i32_0 = arith.constant 0 : i32
    %c0_i32_1 = arith.constant 0 : i32
    return %c0_i32, %arg0, %c0_i32_0 : i32, i32, i32
  }
  func.func @transform_2(%arg0: i32) -> (i32, i32) {
    %c0_i32 = arith.constant 0 : i32
    %c0_i32_0 = arith.constant 0 : i32
    return %arg0, %c0_i32 : i32, i32
  }
}

</mosaic_0001>

<llo_original>
// kernel: tpu_custom_call.1
$region0: #{tpu_custom_call.1}
  #allocation0 [shape = 'u32[]', space=smem, size = 0x4, offset = 0x4, fixed_abs, tag = 'smem constant byte address 0x4 - core index']
  #allocation1 [shape = 'u32[144,128]{1,0:T(1,128)}', space=vmem, size = 0x12000, scoped, tag = 'internal scratch']
  %s0 = inlined_call_operand.hbm [shape: f32[4,8,128], index: 0, kind: input, shape index: {}]
  %s1 = inlined_call_operand.hbm [shape: f32[4,8,128], index: 1, kind: input, shape index: {}]
  %s2 = inlined_call_operand.hbm [shape: f32[8,128], index: 2, kind: output, shape index: {}]
  %s3 = sld [smem:[#allocation0]]
  $region26: #{tpu_custom_call.1} parent=0
    _
  %s5 = ssub.s32 1, %s3
  %s6 = scalar_select 0, %s5, %s3
  $region1: #{tpu_custom_call.1} parent=0
    #allocation2 [shape = 'u8[16384]{0}', space=vmem, size = 0x4000, scoped, tag = 'input window, operand 0, single buffered']
    #allocation3 [shape = 's32[1]{0}', space=sflag, size = 0x4, scoped, tag = 'scoped memory for tpu_custom_call.1']
    #allocation4 [shape = 's32[1]{0}', space=sflag, size = 0x4, scoped, tag = 'scoped memory for tpu_custom_call.1']
    #allocation5 [shape = 'u8[16384]{0}', space=vmem, size = 0x4000, scoped, tag = 'input window, operand 1, single buffered']
    #allocation6 [shape = 's32[1]{0}', space=sflag, size = 0x4, scoped, tag = 'scoped memory for tpu_custom_call.1']
    #allocation7 [shape = 'u8[4096]{0}', space=vmem, size = 0x1000, scoped, tag = 'output window, operand 0, single buffered']
    %7 = vsyncpa [#allocation3], 0
    %8 = vsyncpa [#allocation6], 0
    %9 = vsyncpa [#allocation4], 0
    // Predicated region
    $region2: #{tpu_custom_call.1} parent=1 // pred_check
      _
    $region3: #{tpu_custom_call.1} parent=1 // pred_check_branch
      %11 = sbr.rel (0) target = $region5
    $region4: #{tpu_custom_call.1} parent=1 // pred_region
      %s13 = ssub.s32 512, 512
      %14 = vsyncadd [#allocation3], %s13
      %s15 = sshll.u32 [#allocation2], 4
      %s16 = int_to_ptr.vmem [resolvable:$true] %s15
      %21 = dma.hbm_to_vmem [thread:$0]  %s0, 512, %s16, [#allocation3], 128, 128, 8
    $region5: #{tpu_custom_call.1} parent=1 // pred_fallthru
      _
    // Predicated region
    $region6: #{tpu_custom_call.1} parent=1 // pred_check
      _
    $region7: #{tpu_custom_call.1} parent=1 // pred_check_branch
      %23 = sbr.rel (0) target = $region9
    $region8: #{tpu_custom_call.1} parent=1 // pred_region
      %s25 = ssub.s32 512, 512
      %26 = vsyncadd [#allocation6], %s25
      %s27 = sshll.u32 [#allocation5], 4
      %s28 = int_to_ptr.vmem [resolvable:$true] %s27
      %33 = dma.hbm_to_vmem [thread:$0]  %s1, 512, %s28, [#allocation6], 128, 128, 8
    $region9: #{tpu_custom_call.1} parent=1 // pred_fallthru
      _
    // Predicated region
    $region10: #{tpu_custom_call.1} parent=1 // pred_check
      _
    $region11: #{tpu_custom_call.1} parent=1 // pred_check_branch
      %35 = sbr.rel (0) target = $region13
    $region12: #{tpu_custom_call.1} parent=1 // pred_region
      %36 = dma.done [#allocation3], 512
    $region13: #{tpu_custom_call.1} parent=1 // pred_fallthru
      _
    // Predicated region
    $region14: #{tpu_custom_call.1} parent=1 // pred_check
      _
    $region15: #{tpu_custom_call.1} parent=1 // pred_check_branch
      %38 = sbr.rel (0) target = $region17
    $region16: #{tpu_custom_call.1} parent=1 // pred_region
      %39 = dma.done [#allocation6], 512
    $region17: #{tpu_custom_call.1} parent=1 // pred_fallthru
      _
    %v40 = vld [vmem:[#allocation2] sm:$0xff]
    %s41 = scalar_lea.vmem [#allocation2], 8
    %v42 = vld [vmem:[%s41] sm:$0xff]
    %s43 = scalar_lea.vmem [#allocation2], 16
    %v44 = vld [vmem:[%s43] sm:$0xff]
    %s45 = scalar_lea.vmem [#allocation2], 24
    %v46 = vld [vmem:[%s45] sm:$0xff]
    %v47 = vld [vmem:[#allocation5] sm:$0xff]
    %s48 = scalar_lea.vmem [#allocation5], 8
    %v49 = vld [vmem:[%s48] sm:$0xff]
    %s50 = scalar_lea.vmem [#allocation5], 16
    %v51 = vld [vmem:[%s50] sm:$0xff]
    %s52 = scalar_lea.vmem [#allocation5], 24
    %v53 = vld [vmem:[%s52] sm:$0xff]
    %v54 = vmul.f32 %v44, 0.5
    %v55 = vmul.f32 %v46, 0.5
    %v56 = vmul.f32 %v51, 0.5
    %v57 = vmul.f32 %v53, 0.5
    %v58 = vsub.f32 %v40, %v54
    %v59 = vadd.f32 %v40, %v54
    %v60 = vsub.f32 %v42, %v55
    %v61 = vadd.f32 %v42, %v55
    %v62 = vsub.f32 %v47, %v56
    %v63 = vadd.f32 %v47, %v56
    %v64 = vsub.f32 %v49, %v57
    %v65 = vadd.f32 %v49, %v57
    %v66 = vmax.f32 %v58, %v62
    %v67 = vmax.f32 %v60, %v64
    %v68 = vmin.f32 %v59, %v63
    %v69 = vmin.f32 %v61, %v65
    %v70 = vmul.f32 %v44, %v46
    %v71 = vmul.f32 %v51, %v53
    %vm72 = vcmp.lt.f32.partialorder %v66, %v68
    %vm73 = vcmp.lt.f32.partialorder %v67, %v69
    %vm74 = vmand %vm72, %vm73
    %v75 = vsel %vm74, 1, 0
    %v76 = vcvt.s32.f32 %v75
    %v77 = vsub.f32 %v68, %v66
    %v78 = vsub.f32 %v69, %v67
    %v79 = vmul.f32 %v77, %v78
    %v80 = vmul.f32 %v79, %v76
    %v81 = vadd.f32 %v70, %v71
    %v82 = vsub.f32 %v81, %v80
    %v83 = vadd.f32 %v82, 1e-16
    %v84 = vrcp.pop %v83
    %v85 = vmul.f32 %v83, %v84
    %v86 = vsub.f32 2.0, %v85
    %v87 = vmul.f32 %v84, %v86
    %v88 = vmul.f32 %v80, %v87
    %v89 = vmul.f32 %v88, %v88
    %v90 = vsub.f32 1.0, %v89
    %91 = vst [vmem:[#allocation7] sm:$0xff] %v90
    // Predicated region
    $region18: #{tpu_custom_call.1} parent=1 // pred_check
      _
    $region19: #{tpu_custom_call.1} parent=1 // pred_check_branch
      %93 = sbr.rel (0) target = $region21
    $region20: #{tpu_custom_call.1} parent=1 // pred_region
      %s95 = ssub.s32 128, 128
      %96 = vsyncadd [#allocation4], %s95
      %s98 = sshll.u32 [#allocation7], 4
      %s99 = int_to_ptr.vmem [resolvable:$true] %s98
      %101 = dma.vmem_to_hbm [thread:$0]  %s99, 128, %s2, [#allocation4]
    $region21: #{tpu_custom_call.1} parent=1 // pred_fallthru
      _
    // Predicated region
    $region22: #{tpu_custom_call.1} parent=1 // pred_check
      _
    $region23: #{tpu_custom_call.1} parent=1 // pred_check_branch
      %103 = sbr.rel (0) target = $region25
    $region24: #{tpu_custom_call.1} parent=1 // pred_region
      %104 = dma.done [#allocation4], 128
    $region25: #{tpu_custom_call.1} parent=1 // pred_fallthru
      _
    %105 = vsyncpa [#allocation3], 1
    %106 = vsyncpa [#allocation6], 1
    %107 = vsyncpa [#allocation4], 1

</llo_original>
